<compile_context>
chip_gen: v7x
topology: tpu7x:2x2x1
jax: 0.10.0
libtpu: 0.0.40
codegen_flags: <defaults>
</compile_context>

<pallas_src>
import jax
import jax.numpy as jnp
from jax import lax
from jax.experimental import pallas as pl
from jax.experimental.pallas import tpu as pltpu

MAX_LEN = 128                      # fixed string buffer (lane dimension)
PREFIX = "mom"                     # == MyStackClass(['hi', 'mom']).pop()
PREFIX_LEN = len(PREFIX)
_PREFIX_CODES = tuple(ord(c) for c in PREFIX)


def _encode_batch(strings) -> jnp.ndarray:
    """Encode python strings into a zero-padded (B, MAX_LEN) int32 matrix.

    B is padded up to a multiple of 8 so the block fills all vreg sublanes.
    """
    rows = []
    for s in strings:
        codes = [ord(c) for c in s]
        # Circular roll shifts the string right by PREFIX_LEN; enforce that no
        # real character can wrap past the end of the buffer.
        assert len(codes) <= MAX_LEN - PREFIX_LEN, (
            f"string too long ({len(codes)} > {MAX_LEN - PREFIX_LEN})")
        rows.append(codes + [0] * (MAX_LEN - len(codes)))
    # Pad batch to a multiple of 8 sublanes.
    while len(rows) % 8 != 0:
        rows.append([0] * MAX_LEN)
    return jnp.asarray(rows, dtype=jnp.int32)


def _decode_row(arr) -> str:
    # NOTE: stops at the first 0 code; embedded NULs would truncate (documented
    # edge case, cannot occur for the ASCII strings used here).
    out = []
    for c in [int(v) for v in jnp.asarray(arr).reshape(-1)]:
        if c == 0:
            break
        out.append(chr(c))
    return "".join(out)


def _concat_kernel(s_ref, out_ref):
    # out[b, i] = PREFIX[i]               for i <  PREFIX_LEN
    # out[b, i] = s[b, i - PREFIX_LEN]    for i >= PREFIX_LEN
    idx = lax.broadcasted_iota(jnp.int32, out_ref.shape, 1)
    # Circular lane shift on the XLU; the wrapped-around lanes [0, PREFIX_LEN)
    # hold only zero padding and are overwritten by the constant prefix below.
    shifted = pltpu.roll(s_ref[...], shift=PREFIX_LEN, axis=1)
    out = shifted
    for i, code in enumerate(_PREFIX_CODES):       # prefix folded as constants
        out = jnp.where(idx == i, jnp.int32(code), out)
    out_ref[...] = out


def foo_forward(s_codes: jnp.ndarray) -> jnp.ndarray:
    """Pallas equivalent of Foo.forward over a batch of encoded strings.

    s_codes: (B, MAX_LEN) int32, B a multiple of 8.
    returns: (B, MAX_LEN) int32 codes of ('mom' + s_b) per row.
    """
    assert s_codes.ndim == 2 and s_codes.shape[1] == MAX_LEN
    assert s_codes.shape[0] % 8 == 0
    # Gridless single invocation: whole array is one VMEM block, no pipeline
    # prologue/epilogue, one input DMA + one output DMA total.
    return pl.pallas_call(
        _concat_kernel,
        out_shape=jax.ShapeDtypeStruct(s_codes.shape, jnp.int32),
        in_specs=[pl.BlockSpec(memory_space=pltpu.MemorySpace.VMEM)],
        out_specs=pl.BlockSpec(memory_space=pltpu.MemorySpace.VMEM),
    )(s_codes)


if __name__ == "__main__":
    # Deterministic example inputs: 8 strings of lowercase ascii letters with
    # lengths 1..8, all derived from PRNGKey(0).
    key = jax.random.PRNGKey(0)
    letters = jax.random.randint(key, (8, 8), 0, 26, dtype=jnp.int32) + ord("a")
    strings = [
        "".join(chr(int(c)) for c in letters[b, : b + 1]) for b in range(8)
    ]

    s_codes = _encode_batch(strings)               # (8, 128) int32
    out_codes = jax.block_until_ready(foo_forward(s_codes))

    for b, s in enumerate(strings):
        result = _decode_row(out_codes[b])
        expected = PREFIX + s                      # reference Foo.forward
        assert result == expected, (b, result, expected)
    print("KERNEL_OK")
</pallas_src>

<mosaic_0001>
module attributes {stable_mosaic.version = 11 : i64} {
  func.func @_concat_kernel(%arg0: memref<8x128xi32, #tpu.memory_space<vmem>>, %arg1: memref<8x128xi32, #tpu.memory_space<vmem>>) attributes {dimension_semantics = [], scalar_prefetch = 0 : i64, scratch_operands = 0 : i64, tpu.core_type = #tpu.core_type<tc>} {
    %0 = tpu.iota {dimensions = array<i32: 1>} : vector<8x128xi32>
    %c0 = arith.constant 0 : index
    %c0_0 = arith.constant 0 : index
    %1 = vector.load %arg0[%c0, %c0_0] : memref<8x128xi32, #tpu.memory_space<vmem>>, vector<8x128xi32>
    %c3_i32 = arith.constant 3 : i32
    %2 = tpu.dynamic_rotate %1 by %c3_i32 dim 1 : vector<8x128xi32>, i32 -> vector<8x128xi32>
    %c0_i32 = arith.constant 0 : i32
    %3 = vector.broadcast %c0_i32 : i32 to vector<8x128xi32>
    %4 = arith.cmpi eq, %0, %3 : vector<8x128xi32>
    %c109_i32 = arith.constant 109 : i32
    %5 = vector.broadcast %c109_i32 : i32 to vector<8x128xi32>
    %6 = arith.select %4, %5, %2 : vector<8x128xi1>, vector<8x128xi32>
    %c1_i32 = arith.constant 1 : i32
    %7 = vector.broadcast %c1_i32 : i32 to vector<8x128xi32>
    %8 = arith.cmpi eq, %0, %7 : vector<8x128xi32>
    %c111_i32 = arith.constant 111 : i32
    %9 = vector.broadcast %c111_i32 : i32 to vector<8x128xi32>
    %10 = arith.select %8, %9, %6 : vector<8x128xi1>, vector<8x128xi32>
    %c2_i32 = arith.constant 2 : i32
    %11 = vector.broadcast %c2_i32 : i32 to vector<8x128xi32>
    %12 = arith.cmpi eq, %0, %11 : vector<8x128xi32>
    %c109_i32_1 = arith.constant 109 : i32
    %13 = vector.broadcast %c109_i32_1 : i32 to vector<8x128xi32>
    %14 = arith.select %12, %13, %10 : vector<8x128xi1>, vector<8x128xi32>
    %c0_2 = arith.constant 0 : index
    %c0_3 = arith.constant 0 : index
    %15 = vector.load %arg1[%c0_2, %c0_3] : memref<8x128xi32, #tpu.memory_space<vmem>>, vector<8x128xi32>
    tpu.vector_store %arg1[%c0_2, %c0_3], %14 {strides = array<i32>} : memref<8x128xi32, #tpu.memory_space<vmem>>, vector<8x128xi32>,
    return
  }
}

</mosaic_0001>

<llo_original>
// kernel: tpu_custom_call.1
$region0: #{tpu_custom_call.1}
  #allocation0 [shape = 'u32[]', space=smem, size = 0x4, offset = 0x4, fixed_abs, tag = 'smem constant byte address 0x4 - core index']
  #allocation1 [shape = 'u32[144,128]{1,0:T(1,128)}', space=vmem, size = 0x12000, scoped, tag = 'internal scratch']
  %s0 = inlined_call_operand.hbm [shape: s32[8,128], index: 0, kind: input, shape index: {}]
  %s1 = inlined_call_operand.hbm [shape: s32[8,128], index: 1, kind: output, shape index: {}]
  %s2 = sld [smem:[#allocation0]]
  $region18: #{tpu_custom_call.1} parent=0
    _
  %s4 = ssub.s32 1, %s2
  %s5 = scalar_select 0, %s4, %s2
  $region1: #{tpu_custom_call.1} parent=0
    #allocation2 [shape = 'u8[4096]{0}', space=vmem, size = 0x1000, scoped, tag = 'input window, operand 0, single buffered']
    #allocation3 [shape = 's32[1]{0}', space=sflag, size = 0x4, scoped, tag = 'scoped memory for tpu_custom_call.1']
    #allocation4 [shape = 's32[1]{0}', space=sflag, size = 0x4, scoped, tag = 'scoped memory for tpu_custom_call.1']
    #allocation5 [shape = 'u8[4096]{0}', space=vmem, size = 0x1000, scoped, tag = 'output window, operand 0, single buffered']
    %6 = vsyncpa [#allocation3], 0
    %7 = vsyncpa [#allocation4], 0
    // Predicated region
    $region2: #{tpu_custom_call.1} parent=1 // pred_check
      _
    $region3: #{tpu_custom_call.1} parent=1 // pred_check_branch
      %9 = sbr.rel (0) target = $region5
    $region4: #{tpu_custom_call.1} parent=1 // pred_region
      %s11 = ssub.s32 128, 128
      %12 = vsyncadd [#allocation3], %s11
      %s14 = sshll.u32 [#allocation2], 4
      %s15 = int_to_ptr.vmem [resolvable:$true] %s14
      %17 = dma.hbm_to_vmem [thread:$0]  %s0, 128, %s15, [#allocation3]
    $region5: #{tpu_custom_call.1} parent=1 // pred_fallthru
      _
    // Predicated region
    $region6: #{tpu_custom_call.1} parent=1 // pred_check
      _
    $region7: #{tpu_custom_call.1} parent=1 // pred_check_branch
      %19 = sbr.rel (0) target = $region9
    $region8: #{tpu_custom_call.1} parent=1 // pred_region
      %20 = dma.done [#allocation3], 128
    $region9: #{tpu_custom_call.1} parent=1 // pred_fallthru
      _
    %v21 = vlaneseq
    %v22 = vand.u32 %v21, 127
    %v23 = vld [vmem:[#allocation2] sm:$0xff]
    %24 = vrot.lane.b32.xlu0 %v23, 3
    %v25 = vpop.permute.xlu0 %24
    %vm26 = vcmp.eq.s32.totalorder %v22, 0
    %v27 = vsel %vm26, 109, %v25
    %vm28 = vcmp.eq.s32.totalorder %v22, 1
    %v29 = vsel %vm28, 111, %v27
    %vm30 = vcmp.eq.s32.totalorder %v22, 2
    %v31 = vsel %vm30, 109, %v29
    %32 = vst [vmem:[#allocation5] sm:$0xff] %v31
    // Predicated region
    $region10: #{tpu_custom_call.1} parent=1 // pred_check
      _
    $region11: #{tpu_custom_call.1} parent=1 // pred_check_branch
      %34 = sbr.rel (0) target = $region13
    $region12: #{tpu_custom_call.1} parent=1 // pred_region
      %s36 = ssub.s32 128, 128
      %37 = vsyncadd [#allocation4], %s36
      %s39 = sshll.u32 [#allocation5], 4
      %s40 = int_to_ptr.vmem [resolvable:$true] %s39
      %42 = dma.vmem_to_hbm [thread:$0]  %s40, 128, %s1, [#allocation4]
    $region13: #{tpu_custom_call.1} parent=1 // pred_fallthru
      _
    // Predicated region
    $region14: #{tpu_custom_call.1} parent=1 // pred_check
      _
    $region15: #{tpu_custom_call.1} parent=1 // pred_check_branch
      %44 = sbr.rel (0) target = $region17
    $region16: #{tpu_custom_call.1} parent=1 // pred_region
      %45 = dma.done [#allocation4], 128
    $region17: #{tpu_custom_call.1} parent=1 // pred_fallthru
      _
    %46 = vsyncpa [#allocation3], 1
    %47 = vsyncpa [#allocation4], 1

</llo_original>
